<compile_context>
chip_gen: v7x
topology: tpu7x:2x2x1
jax: 0.10.0
libtpu: 0.0.40
codegen_flags: <defaults>
</compile_context>

<pallas_src>
import math
import functools

import jax
import jax.numpy as jnp
from jax.experimental import pallas as pl
from jax.experimental.pallas import tpu as pltpu

# ---- module hyperparameters (small config consistent with Gaussian_MLP defaults) ----
TRANSITION_DIM = 8
HORIZON_STEPS = 4
COND_DIM = 32
MLP_DIMS = [128, 128, 128]                   # hidden widths (small stand-in for [256,256,256])
OUTPUT_DIM = TRANSITION_DIM * HORIZON_STEPS  # 32
STD_MIN = 0.01
STD_MAX = 1.0
LOGVAR_MIN = math.log(STD_MIN ** 2)
LOGVAR_MAX = math.log(STD_MAX ** 2)

H0 = MLP_DIMS[0]       # mean-head first hidden width (split point of fused first layer)
H_LV = MLP_DIMS[-1]    # logvar-head hidden width
H_LAST = MLP_DIMS[-1]  # mean-head last hidden width


def _tpu_config():
    """(elementwise act dtype, #TensorCores) picked from the local TPU generation.

    bf16 VPU/EUP exists on v6e/v7x — the transcendental (EUP) slot is the binding unit
    for this kernel, so packed-bf16 elementwise math roughly doubles its throughput.
    v5e and older have no bf16 vector units -> keep elementwise math in f32.
    """
    try:
        kind = jax.devices()[0].device_kind.lower()
    except Exception:
        kind = ""
    bf16_ok = ("v6" in kind) or ("v7" in kind)
    num_tc = 2 if "v7" in kind else 1
    return (jnp.bfloat16 if bf16_ok else jnp.float32), num_tc


def _mish(z_f32, act_dtype):
    """mish(z) = z * tanh(softplus(z)) with a single EUP transcendental.

    tanh(softplus(z)) = (t^2-1)/(t^2+1), t = 1+e^z, rewritten as u/(u+2) with
    u = e*(e+2) so there is no (1+e)^2 - 1 cancellation (bf16-safe).  The z<=30
    clamp keeps u finite; for z > 30 the ratio is exactly 1, i.e. mish(z)==z,
    which is the correct limit.
    """
    z = z_f32.astype(act_dtype)
    e = jnp.exp(jnp.minimum(z, 30.0))
    u = e * (e + 2.0)
    if act_dtype == jnp.float32:
        # v5e path: keep the reciprocal on the (otherwise idle-ish) EUP rcp slot.
        # TODO(synk): if a v5e bundle dump shows EUP saturated with VALU slack, move this
        # reciprocal onto the VPU (bit-trick guess + 2 Newton steps) per the review.
        r = u * pl.reciprocal(u + 2.0, approx=True)
    else:
        # v6e/v7x path: packed bf16 vregs; plain division lowers to the bf16 EUP path.
        r = u / (u + 2.0)
    return z * r


def gaussian_mlp_kernel(x_ref,
                        win_ref, bin_ref,
                        w1_ref, b1_ref,
                        w2_ref, b2_ref,
                        wout_ref, bout_ref,
                        out_ref, *, act_dtype):
    def dot_acc(a, w):
        # bf16 operands on the MXU, f32 accumulation.  On the bf16-activation path `a`
        # is already bf16 so the cast traces away (no per-layer VALU cast).
        return jnp.dot(a.astype(jnp.bfloat16), w, preferred_element_type=jnp.float32)

    x = x_ref[...]                                                  # [bb, cond] bf16

    # Fused first layer of BOTH heads: one [cond, H0+H_LV] matmul, split at a
    # 128-lane boundary (no relayout).
    a0 = _mish(dot_acc(x, win_ref[...]) + bin_ref[...], act_dtype)  # [bb, H0+H_LV]
    h = a0[:, :H0]                                                  # mean head
    g = a0[:, H0:]                                                  # logvar head

    # Remaining mean-head hidden layers.
    h = _mish(dot_acc(h, w1_ref[...]) + b1_ref[...], act_dtype)
    h = _mish(dot_acc(h, w2_ref[...]) + b2_ref[...], act_dtype)

    # Block-diagonal output projection as two K=128 dots summed into one f32
    # [bb, 2*out] accumulator: top half of wout maps h -> mean lanes, bottom half
    # maps g -> scale lanes.  Avoids materializing a concat([h, g]) VMEM copy.
    wout = wout_ref[...]
    zo = (dot_acc(h, wout[:H_LAST, :])
          + dot_acc(g, wout[H_LAST:, :])
          + bout_ref[...])                                          # [bb, 2*out] f32

    # Epilogue: tanh on the first OUTPUT_DIM lanes (mean), clamp+exp(0.5*) on the rest
    # (scale).  Both branches are evaluated on the full 64-lane slab and merged with a
    # lane mask — avoids sub-128-lane slice/concat relayouts and keeps the store a single
    # lane-dense write (kept at 64 lanes: padding to 128 would double writeback bytes).
    z = zo.astype(act_dtype)
    lane = jax.lax.broadcasted_iota(jnp.int32, zo.shape, 1)
    mean_val = jnp.tanh(z)
    scale_val = jnp.exp(0.5 * jnp.clip(z, LOGVAR_MIN, LOGVAR_MAX))
    out_ref[...] = jnp.where(lane < OUTPUT_DIM, mean_val, scale_val).astype(out_ref.dtype)


def fuse_params(params):
    """Fold the 6 Linear layers into 4 fused operands (done once, outside the kernel)."""
    (w0, b0, w1, b1, w2, b2, w3, b3, v0, c0, v1, c1) = params
    w_in = jnp.concatenate([w0, v0], axis=1).astype(jnp.bfloat16)   # [cond, H0+H_LV]
    b_in = jnp.concatenate([b0, c0], axis=1)                        # [1, H0+H_LV] f32
    w_out = jnp.zeros((H_LAST + H_LV, 2 * OUTPUT_DIM), jnp.float32)
    w_out = w_out.at[:H_LAST, :OUTPUT_DIM].set(w3)
    w_out = w_out.at[H_LAST:, OUTPUT_DIM:].set(v1)
    w_out = w_out.astype(jnp.bfloat16)                              # [2H, 2*out]
    b_out = jnp.concatenate([b3, c1], axis=1)                       # [1, 2*out] f32
    return (w_in, b_in,
            w1.astype(jnp.bfloat16), b1,
            w2.astype(jnp.bfloat16), b2,
            w_out, b_out)


def _pick_batch_tile(B, cap, num_tc):
    """Largest valid batch tile <= cap; ensure >= num_tc grid steps on multi-TC chips."""
    if B <= cap:
        bb = B
    else:
        # largest divisor of B that is <= cap and sublane-aligned (multiple of 8)
        bb = max((d for d in range(8, cap + 1, 8) if B % d == 0), default=B)
    # v7x: make sure dimension_semantics=("parallel",) has >= 2 steps to shard across
    # both TensorCores (only when B is big enough to split into aligned tiles).
    if num_tc > 1 and (B // bb) < num_tc and B % (num_tc * 8) == 0:
        bb = B // num_tc
    return bb


def gaussian_mlp_forward(x, fused, *, max_block_b=2048):
    """Returns (mean, scale).  max_block_b=2048 keeps per-step VMEM around ~5 MiB
    (comfortably under the 16/32/32 MiB scoped VMEM defaults on v5e/v6e/v7x) while
    amortizing the ~0.35 us per-grid-step overhead over many rows."""
    act_dtype, num_tc = _tpu_config()
    B = x.shape[0]
    bb = _pick_batch_tile(B, max_block_b, num_tc)
    assert B % bb == 0, "batch must be a multiple of the batch tile"

    (w_in, b_in, w1, b1, w2, b2, w_out, b_out) = fused
    two_out = 2 * OUTPUT_DIM

    # The kernel rounds x to bf16 at the first dot anyway; pre-cast in the wrapper to
    # halve the streamed input HBM bytes and the x VMEM tile (zero semantic change).
    x_bf16 = x.astype(jnp.bfloat16)

    def resident(arr):  # full block, constant index_map -> stays VMEM-resident across grid
        return pl.BlockSpec(arr.shape, lambda i: (0, 0))

    # Advisory roofline for XLA scheduling around this kernel.
    flops = 2 * B * (COND_DIM * w_in.shape[1]
                     + w1.shape[0] * w1.shape[1]
                     + w2.shape[0] * w2.shape[1]
                     + w_out.shape[0] * two_out)
    transcendentals = B * (w_in.shape[1] + w1.shape[1] + w2.shape[1] + 2 * two_out)
    bytes_accessed = (sum(int(a.size) * a.dtype.itemsize for a in fused)
                      + B * COND_DIM * 2 + B * two_out * 4)

    kernel = functools.partial(gaussian_mlp_kernel, act_dtype=act_dtype)

    out = pl.pallas_call(
        kernel,
        out_shape=jax.ShapeDtypeStruct((B, two_out), jnp.float32),
        grid_spec=pltpu.PrefetchScalarGridSpec(
            num_scalar_prefetch=0,
            grid=(B // bb,),
            in_specs=[pl.BlockSpec((bb, COND_DIM), lambda i: (i, 0)),
                      resident(w_in), resident(b_in),
                      resident(w1), resident(b1),
                      resident(w2), resident(b2),
                      resident(w_out), resident(b_out)],
            out_specs=pl.BlockSpec((bb, two_out), lambda i: (i, 0)),
        ),
        compiler_params=pltpu.CompilerParams(dimension_semantics=("parallel",)),
        cost_estimate=pl.CostEstimate(flops=flops,
                                      transcendentals=transcendentals,
                                      bytes_accessed=bytes_accessed),
    )(x_bf16, w_in, b_in, w1, b1, w2, b2, w_out, b_out)

    return out[:, :OUTPUT_DIM], out[:, OUTPUT_DIM:]   # (mean, scale), lane-dense slab split


# ------------------------------ parameters & references ------------------------------

def init_params(key):
    """Deterministic per-layer Linear params, stored as W:[in,out], b:[1,out]."""
    dims_mean = [COND_DIM] + MLP_DIMS + [OUTPUT_DIM]
    dims_lv = [COND_DIM] + MLP_DIMS[-1:] + [OUTPUT_DIM]
    params = []
    for dims in (dims_mean, dims_lv):
        for din, dout in zip(dims[:-1], dims[1:]):
            key, kw, kb = jax.random.split(key, 3)
            bound = 1.0 / math.sqrt(din)
            w = jax.random.uniform(kw, (din, dout), jnp.float32, -bound, bound)
            b = jax.random.uniform(kb, (1, dout), jnp.float32, -bound, bound)
            params += [w, b]
    return params


def reference_forward(x, params):
    """Faithful f32 Gaussian_MLP forward (the module semantics)."""
    (w0, b0, w1, b1, w2, b2, w3, b3, v0, c0, v1, c1) = params
    mish = lambda z: z * jnp.tanh(jax.nn.softplus(z))
    h = mish(x @ w0 + b0)
    h = mish(h @ w1 + b1)
    h = mish(h @ w2 + b2)
    mean = jnp.tanh(h @ w3 + b3)
    g = mish(x @ v0 + c0)
    lv = jnp.clip(g @ v1 + c1, LOGVAR_MIN, LOGVAR_MAX)
    return mean, jnp.exp(0.5 * lv)


def kernel_math_reference(x, fused, act_dtype):
    """Mirror of the kernel's algorithm in plain JAX (same casts; exact division
    stands in for the approx EUP reciprocal on the f32 path)."""
    (w_in, b_in, w1, b1, w2, b2, w_out, b_out) = fused

    def dot_acc(a, w):
        return jnp.dot(a.astype(jnp.bfloat16), w, preferred_element_type=jnp.float32)

    def mish(zf):
        z = zf.astype(act_dtype)
        e = jnp.exp(jnp.minimum(z, 30.0))
        u = e * (e + 2.0)
        return z * (u / (u + 2.0))

    a0 = mish(dot_acc(x, w_in) + b_in)
    h, g = a0[:, :H0], a0[:, H0:]
    h = mish(dot_acc(h, w1) + b1)
    h = mish(dot_acc(h, w2) + b2)
    zo = dot_acc(h, w_out[:H_LAST, :]) + dot_acc(g, w_out[H_LAST:, :]) + b_out
    z = zo.astype(act_dtype)
    mean = jnp.tanh(z[:, :OUTPUT_DIM]).astype(jnp.float32)
    lv = jnp.clip(z[:, OUTPUT_DIM:], LOGVAR_MIN, LOGVAR_MAX)
    return mean, jnp.exp(0.5 * lv).astype(jnp.float32)


if __name__ == "__main__":
    key = jax.random.PRNGKey(0)
    kx, kp = jax.random.split(key)
    B = 4
    x = jax.random.normal(kx, (B, COND_DIM), jnp.float32)
    params = init_params(kp)
    fused = fuse_params(params)

    out_mean, out_scale = gaussian_mlp_forward(x, fused)
    jax.block_until_ready((out_mean, out_scale))
    assert out_mean.shape == (B, OUTPUT_DIM) and out_scale.shape == (B, OUTPUT_DIM)

    act_dtype, _ = _tpu_config()

    # (1) Algorithm-mirror check: same bf16-at-dot / one-exp-Mish algorithm in plain JAX.
    #     f32 path differs only by the approx EUP reciprocal; bf16 path differs only by
    #     hardware transcendental rounding (a few bf16 ulps), hence the wider tolerance.
    tol_alg = 5e-3 if act_dtype == jnp.float32 else 2e-2
    m_alg, s_alg = kernel_math_reference(x, fused, act_dtype)
    assert jnp.allclose(out_mean, m_alg, atol=tol_alg, rtol=tol_alg)
    assert jnp.allclose(out_scale, s_alg, atol=tol_alg, rtol=tol_alg)

    # (2) Module-semantics check: faithful f32 Gaussian_MLP forward.  Tolerance budgets
    #     bf16 matmul-operand rounding (all chips) plus bf16 elementwise math on v6e/v7x.
    tol_mod = 3e-2 if act_dtype == jnp.float32 else 5e-2
    m_f32, s_f32 = reference_forward(x, params)
    assert jnp.allclose(out_mean, m_f32, atol=tol_mod, rtol=tol_mod)
    assert jnp.allclose(out_scale, s_f32, atol=tol_mod, rtol=tol_mod)

    print("KERNEL_OK")
</pallas_src>

<mosaic_0001>
module attributes {stable_mosaic.version = 11 : i64} {
  func.func @gaussian_mlp_kernel(%arg0: i32, %arg1: memref<4x32xbf16, #tpu.memory_space<vmem>>, %arg2: memref<32x256xbf16, #tpu.memory_space<vmem>>, %arg3: memref<1x256xf32, #tpu.memory_space<vmem>>, %arg4: memref<128x128xbf16, #tpu.memory_space<vmem>>, %arg5: memref<1x128xf32, #tpu.memory_space<vmem>>, %arg6: memref<128x128xbf16, #tpu.memory_space<vmem>>, %arg7: memref<1x128xf32, #tpu.memory_space<vmem>>, %arg8: memref<256x64xbf16, #tpu.memory_space<vmem>>, %arg9: memref<1x64xf32, #tpu.memory_space<vmem>>, %arg10: memref<4x64xf32, #tpu.memory_space<vmem>>) attributes {dimension_semantics = [#tpu.dimension_semantics<parallel>], iteration_bounds = array<i64: 1>, scalar_prefetch = 0 : i64, scratch_operands = 0 : i64, tpu.core_type = #tpu.core_type<tc>, window_params = [{transform_indices = @transform_0, window_bounds = array<i64: 4, 32>}, {pipeline_mode = #tpu.pipeline_mode<synchronous>, transform_indices = @transform_1, window_bounds = array<i64: 32, 256>}, {pipeline_mode = #tpu.pipeline_mode<synchronous>, transform_indices = @transform_2, window_bounds = array<i64: 1, 256>}, {pipeline_mode = #tpu.pipeline_mode<synchronous>, transform_indices = @transform_3, window_bounds = array<i64: 128, 128>}, {pipeline_mode = #tpu.pipeline_mode<synchronous>, transform_indices = @transform_4, window_bounds = array<i64: 1, 128>}, {pipeline_mode = #tpu.pipeline_mode<synchronous>, transform_indices = @transform_5, window_bounds = array<i64: 128, 128>}, {pipeline_mode = #tpu.pipeline_mode<synchronous>, transform_indices = @transform_6, window_bounds = array<i64: 1, 128>}, {pipeline_mode = #tpu.pipeline_mode<synchronous>, transform_indices = @transform_7, window_bounds = array<i64: 256, 64>}, {pipeline_mode = #tpu.pipeline_mode<synchronous>, transform_indices = @transform_8, window_bounds = array<i64: 1, 64>}, {transform_indices = @transform_9, window_bounds = array<i64: 4, 64>}]} {
    %c0 = arith.constant 0 : index
    %c0_0 = arith.constant 0 : index
    %0 = vector.load %arg1[%c0, %c0_0] : memref<4x32xbf16, #tpu.memory_space<vmem>>, vector<4x32xbf16>
    %c0_1 = arith.constant 0 : index
    %c0_2 = arith.constant 0 : index
    %1 = vector.load %arg2[%c0_1, %c0_2] : memref<32x256xbf16, #tpu.memory_space<vmem>>, vector<32x256xbf16>
    %cst = arith.constant dense<0.000000e+00> : vector<4x256xf32>
    %2 = tpu.matmul %0, %1, %cst {dimension_numbers = #tpu.dot_dimension_numbers<[1], [0], [0], [1], [0, 0, 1, 1], [], []>} : vector<4x32xbf16>, vector<32x256xbf16>, vector<4x256xf32> -> vector<4x256xf32>
    %c0_3 = arith.constant 0 : index
    %c0_4 = arith.constant 0 : index
    %3 = vector.load %arg3[%c0_3, %c0_4] : memref<1x256xf32, #tpu.memory_space<vmem>>, vector<1x256xf32>
    %4 = vector.broadcast %3 : vector<1x256xf32> to vector<4x256xf32>
    %5 = arith.addf %2, %4 : vector<4x256xf32>
    %cst_5 = arith.constant 3.000000e+01 : f32
    %6 = vector.broadcast %cst_5 : f32 to vector<4x256xf32>
    %7 = arith.minimumf %5, %6 : vector<4x256xf32>
    %8 = math.exp %7 : vector<4x256xf32>
    %cst_6 = arith.constant 2.000000e+00 : f32
    %9 = vector.broadcast %cst_6 : f32 to vector<4x256xf32>
    %10 = arith.addf %8, %9 : vector<4x256xf32>
    %11 = arith.mulf %8, %10 : vector<4x256xf32>
    %cst_7 = arith.constant 2.000000e+00 : f32
    %12 = vector.broadcast %cst_7 : f32 to vector<4x256xf32>
    %13 = arith.addf %11, %12 : vector<4x256xf32>
    %14 = tpu.reciprocal %13 {approx = true} : vector<4x256xf32> -> vector<4x256xf32>
    %15 = arith.mulf %11, %14 : vector<4x256xf32>
    %16 = arith.mulf %5, %15 : vector<4x256xf32>
    %17 = vector.extract_strided_slice %16 {offsets = [0, 0], sizes = [4, 128], strides = [1, 1]} : vector<4x256xf32> to vector<4x128xf32>
    %18 = vector.extract_strided_slice %16 {offsets = [0, 128], sizes = [4, 128], strides = [1, 1]} : vector<4x256xf32> to vector<4x128xf32>
    %c0_8 = arith.constant 0 : index
    %c0_9 = arith.constant 0 : index
    %19 = vector.load %arg4[%c0_8, %c0_9] : memref<128x128xbf16, #tpu.memory_space<vmem>>, vector<128x128xbf16>
    %20 = arith.truncf %17 : vector<4x128xf32> to vector<4x128xbf16>
    %cst_10 = arith.constant dense<0.000000e+00> : vector<4x128xf32>
    %21 = tpu.matmul %20, %19, %cst_10 {dimension_numbers = #tpu.dot_dimension_numbers<[1], [0], [0], [1], [0, 0, 1, 1], [], []>} : vector<4x128xbf16>, vector<128x128xbf16>, vector<4x128xf32> -> vector<4x128xf32>
    %c0_11 = arith.constant 0 : index
    %c0_12 = arith.constant 0 : index
    %22 = vector.load %arg5[%c0_11, %c0_12] : memref<1x128xf32, #tpu.memory_space<vmem>>, vector<1x128xf32>
    %23 = vector.broadcast %22 : vector<1x128xf32> to vector<4x128xf32>
    %24 = arith.addf %21, %23 : vector<4x128xf32>
    %cst_13 = arith.constant 3.000000e+01 : f32
    %25 = vector.broadcast %cst_13 : f32 to vector<4x128xf32>
    %26 = arith.minimumf %24, %25 : vector<4x128xf32>
    %27 = math.exp %26 : vector<4x128xf32>
    %cst_14 = arith.constant 2.000000e+00 : f32
    %28 = vector.broadcast %cst_14 : f32 to vector<4x128xf32>
    %29 = arith.addf %27, %28 : vector<4x128xf32>
    %30 = arith.mulf %27, %29 : vector<4x128xf32>
    %cst_15 = arith.constant 2.000000e+00 : f32
    %31 = vector.broadcast %cst_15 : f32 to vector<4x128xf32>
    %32 = arith.addf %30, %31 : vector<4x128xf32>
    %33 = tpu.reciprocal %32 {approx = true} : vector<4x128xf32> -> vector<4x128xf32>
    %34 = arith.mulf %30, %33 : vector<4x128xf32>
    %35 = arith.mulf %24, %34 : vector<4x128xf32>
    %c0_16 = arith.constant 0 : index
    %c0_17 = arith.constant 0 : index
    %36 = vector.load %arg6[%c0_16, %c0_17] : memref<128x128xbf16, #tpu.memory_space<vmem>>, vector<128x128xbf16>
    %37 = arith.truncf %35 : vector<4x128xf32> to vector<4x128xbf16>
    %cst_18 = arith.constant dense<0.000000e+00> : vector<4x128xf32>
    %38 = tpu.matmul %37, %36, %cst_18 {dimension_numbers = #tpu.dot_dimension_numbers<[1], [0], [0], [1], [0, 0, 1, 1], [], []>} : vector<4x128xbf16>, vector<128x128xbf16>, vector<4x128xf32> -> vector<4x128xf32>
    %c0_19 = arith.constant 0 : index
    %c0_20 = arith.constant 0 : index
    %39 = vector.load %arg7[%c0_19, %c0_20] : memref<1x128xf32, #tpu.memory_space<vmem>>, vector<1x128xf32>
    %40 = vector.broadcast %39 : vector<1x128xf32> to vector<4x128xf32>
    %41 = arith.addf %38, %40 : vector<4x128xf32>
    %cst_21 = arith.constant 3.000000e+01 : f32
    %42 = vector.broadcast %cst_21 : f32 to vector<4x128xf32>
    %43 = arith.minimumf %41, %42 : vector<4x128xf32>
    %44 = math.exp %43 : vector<4x128xf32>
    %cst_22 = arith.constant 2.000000e+00 : f32
    %45 = vector.broadcast %cst_22 : f32 to vector<4x128xf32>
    %46 = arith.addf %44, %45 : vector<4x128xf32>
    %47 = arith.mulf %44, %46 : vector<4x128xf32>
    %cst_23 = arith.constant 2.000000e+00 : f32
    %48 = vector.broadcast %cst_23 : f32 to vector<4x128xf32>
    %49 = arith.addf %47, %48 : vector<4x128xf32>
    %50 = tpu.reciprocal %49 {approx = true} : vector<4x128xf32> -> vector<4x128xf32>
    %51 = arith.mulf %47, %50 : vector<4x128xf32>
    %52 = arith.mulf %41, %51 : vector<4x128xf32>
    %c0_24 = arith.constant 0 : index
    %c0_25 = arith.constant 0 : index
    %53 = vector.load %arg8[%c0_24, %c0_25] : memref<256x64xbf16, #tpu.memory_space<vmem>>, vector<256x64xbf16>
    %54 = vector.extract_strided_slice %53 {offsets = [0, 0], sizes = [128, 64], strides = [1, 1]} : vector<256x64xbf16> to vector<128x64xbf16>
    %55 = arith.truncf %52 : vector<4x128xf32> to vector<4x128xbf16>
    %cst_26 = arith.constant dense<0.000000e+00> : vector<4x64xf32>
    %56 = tpu.matmul %55, %54, %cst_26 {dimension_numbers = #tpu.dot_dimension_numbers<[1], [0], [0], [1], [0, 0, 1, 1], [], []>} : vector<4x128xbf16>, vector<128x64xbf16>, vector<4x64xf32> -> vector<4x64xf32>
    %57 = vector.extract_strided_slice %53 {offsets = [128, 0], sizes = [128, 64], strides = [1, 1]} : vector<256x64xbf16> to vector<128x64xbf16>
    %58 = arith.truncf %18 : vector<4x128xf32> to vector<4x128xbf16>
    %cst_27 = arith.constant dense<0.000000e+00> : vector<4x64xf32>
    %59 = tpu.matmul %58, %57, %cst_27 {dimension_numbers = #tpu.dot_dimension_numbers<[1], [0], [0], [1], [0, 0, 1, 1], [], []>} : vector<4x128xbf16>, vector<128x64xbf16>, vector<4x64xf32> -> vector<4x64xf32>
    %60 = arith.addf %56, %59 : vector<4x64xf32>
    %c0_28 = arith.constant 0 : index
    %c0_29 = arith.constant 0 : index
    %61 = vector.load %arg9[%c0_28, %c0_29] : memref<1x64xf32, #tpu.memory_space<vmem>>, vector<1x64xf32>
    %62 = vector.broadcast %61 : vector<1x64xf32> to vector<4x64xf32>
    %63 = arith.addf %60, %62 : vector<4x64xf32>
    %64 = tpu.iota {dimensions = array<i32: 1>} : vector<4x64xi32>
    %65 = math.tanh %63 : vector<4x64xf32>
    %cst_30 = arith.constant -9.21034049 : f32
    %cst_31 = arith.constant 0.000000e+00 : f32
    %66 = vector.broadcast %cst_30 : f32 to vector<4x64xf32>
    %67 = arith.maximumf %66, %63 : vector<4x64xf32>
    %68 = vector.broadcast %cst_31 : f32 to vector<4x64xf32>
    %69 = arith.minimumf %68, %67 : vector<4x64xf32>
    %cst_32 = arith.constant 5.000000e-01 : f32
    %70 = vector.broadcast %cst_32 : f32 to vector<4x64xf32>
    %71 = arith.mulf %70, %69 : vector<4x64xf32>
    %72 = math.exp %71 : vector<4x64xf32>
    %c32_i32 = arith.constant 32 : i32
    %73 = vector.broadcast %c32_i32 : i32 to vector<4x64xi32>
    %74 = arith.cmpi slt, %64, %73 : vector<4x64xi32>
    %75 = arith.select %74, %65, %72 : vector<4x64xi1>, vector<4x64xf32>
    %c0_33 = arith.constant 0 : index
    %c0_34 = arith.constant 0 : index
    %76 = vector.load %arg10[%c0_33, %c0_34] : memref<4x64xf32, #tpu.memory_space<vmem>>, vector<4x64xf32>
    tpu.vector_store %arg10[%c0_33, %c0_34], %75 {strides = array<i32>} : memref<4x64xf32, #tpu.memory_space<vmem>>, vector<4x64xf32>,
    return
  }
  func.func @transform_0(%arg0: i32) -> (i32, i32) {
    %c0_i32 = arith.constant 0 : i32
    %c0_i32_0 = arith.constant 0 : i32
    return %arg0, %c0_i32 : i32, i32
  }
  func.func @transform_1(%arg0: i32) -> (i32, i32) {
    %c0_i32 = arith.constant 0 : i32
    %c0_i32_0 = arith.constant 0 : i32
    %c0_i32_1 = arith.constant 0 : i32
    return %c0_i32, %c0_i32_0 : i32, i32
  }
  func.func @transform_2(%arg0: i32) -> (i32, i32) {
    %c0_i32 = arith.constant 0 : i32
    %c0_i32_0 = arith.constant 0 : i32
    %c0_i32_1 = arith.constant 0 : i32
    return %c0_i32, %c0_i32_0 : i32, i32
  }
  func.func @transform_3(%arg0: i32) -> (i32, i32) {
    %c0_i32 = arith.constant 0 : i32
    %c0_i32_0 = arith.constant 0 : i32
    %c0_i32_1 = arith.constant 0 : i32
    return %c0_i32, %c0_i32_0 : i32, i32
  }
  func.func @transform_4(%arg0: i32) -> (i32, i32) {
    %c0_i32 = arith.constant 0 : i32
    %c0_i32_0 = arith.constant 0 : i32
    %c0_i32_1 = arith.constant 0 : i32
    return %c0_i32, %c0_i32_0 : i32, i32
  }
  func.func @transform_5(%arg0: i32) -> (i32, i32) {
    %c0_i32 = arith.constant 0 : i32
    %c0_i32_0 = arith.constant 0 : i32
    %c0_i32_1 = arith.constant 0 : i32
    return %c0_i32, %c0_i32_0 : i32, i32
  }
  func.func @transform_6(%arg0: i32) -> (i32, i32) {
    %c0_i32 = arith.constant 0 : i32
    %c0_i32_0 = arith.constant 0 : i32
    %c0_i32_1 = arith.constant 0 : i32
    return %c0_i32, %c0_i32_0 : i32, i32
  }
  func.func @transform_7(%arg0: i32) -> (i32, i32) {
    %c0_i32 = arith.constant 0 : i32
    %c0_i32_0 = arith.constant 0 : i32
    %c0_i32_1 = arith.constant 0 : i32
    return %c0_i32, %c0_i32_0 : i32, i32
  }
  func.func @transform_8(%arg0: i32) -> (i32, i32) {
    %c0_i32 = arith.constant 0 : i32
    %c0_i32_0 = arith.constant 0 : i32
    %c0_i32_1 = arith.constant 0 : i32
    return %c0_i32, %c0_i32_0 : i32, i32
  }
  func.func @transform_9(%arg0: i32) -> (i32, i32) {
    %c0_i32 = arith.constant 0 : i32
    %c0_i32_0 = arith.constant 0 : i32
    return %arg0, %c0_i32 : i32, i32
  }
}

</mosaic_0001>

<llo_original>
// kernel: tpu_custom_call.1
$region0: #{tpu_custom_call.1}
  #allocation0 [shape = 'u32[]', space=smem, size = 0x4, offset = 0x4, fixed_abs, tag = 'smem constant byte address 0x4 - core index']
  #allocation1 [shape = 'u32[144,128]{1,0:T(1,128)}', space=vmem, size = 0x12000, scoped, tag = 'internal scratch']
  %s0 = inlined_call_operand.vmem [shape: bf16[4,32], index: 0, kind: input, shape index: {}]
  %s1 = inlined_call_operand.vmem [shape: bf16[32,256], index: 1, kind: input, shape index: {}]
  %s2 = inlined_call_operand.vmem [shape: f32[1,256], index: 2, kind: input, shape index: {}]
  %s3 = inlined_call_operand.vmem [shape: bf16[128,128], index: 3, kind: input, shape index: {}]
  %s4 = inlined_call_operand.vmem [shape: f32[1,128], index: 4, kind: input, shape index: {}]
  %s5 = inlined_call_operand.vmem [shape: bf16[128,128], index: 5, kind: input, shape index: {}]
  %s6 = inlined_call_operand.vmem [shape: f32[1,128], index: 6, kind: input, shape index: {}]
  %s7 = inlined_call_operand.vmem [shape: bf16[256,64], index: 7, kind: input, shape index: {}]
  %s8 = inlined_call_operand.vmem [shape: f32[1,64], index: 8, kind: input, shape index: {}]
  %s9 = inlined_call_operand.hbm [shape: f32[4,64], index: 9, kind: output, shape index: {}]
  %s10 = sld [smem:[#allocation0]]
  $region46: #{tpu_custom_call.1} parent=0
    _
  %s12 = ssub.s32 1, %s10
  %s13 = scalar_select 0, %s12, %s10
  $region1: #{tpu_custom_call.1} parent=0
    #allocation2 [shape = 'u8[2048]{0}', space=vmem, size = 0x800, scoped, tag = 'output window, operand 0, single buffered']
    #allocation3 [shape = 's32[1]{0}', space=sflag, size = 0x4, scoped, tag = 'scoped memory for tpu_custom_call.1']
    %14 = vsyncpa [#allocation3], 0
    // Predicated region
    $region2: #{tpu_custom_call.1} parent=1 // pred_check
      _
    $region3: #{tpu_custom_call.1} parent=1 // pred_check_branch
      %16 = sbr.rel (0) target = $region5
    $region4: #{tpu_custom_call.1} parent=1 // pred_region
      _
    $region5: #{tpu_custom_call.1} parent=1 // pred_fallthru
      _
    // Predicated region
    $region6: #{tpu_custom_call.1} parent=1 // pred_check
      _
    $region7: #{tpu_custom_call.1} parent=1 // pred_check_branch
      %18 = sbr.rel (0) target = $region9
    $region8: #{tpu_custom_call.1} parent=1 // pred_region
      _
    $region9: #{tpu_custom_call.1} parent=1 // pred_fallthru
      _
    // Predicated region
    $region10: #{tpu_custom_call.1} parent=1 // pred_check
      _
    $region11: #{tpu_custom_call.1} parent=1 // pred_check_branch
      %20 = sbr.rel (0) target = $region13
    $region12: #{tpu_custom_call.1} parent=1 // pred_region
      _
    $region13: #{tpu_custom_call.1} parent=1 // pred_fallthru
      _
    // Predicated region
    $region14: #{tpu_custom_call.1} parent=1 // pred_check
      _
    $region15: #{tpu_custom_call.1} parent=1 // pred_check_branch
      %22 = sbr.rel (0) target = $region17
    $region16: #{tpu_custom_call.1} parent=1 // pred_region
      _
    $region17: #{tpu_custom_call.1} parent=1 // pred_fallthru
      _
    // Predicated region
    $region18: #{tpu_custom_call.1} parent=1 // pred_check
      _
    $region19: #{tpu_custom_call.1} parent=1 // pred_check_branch
      %24 = sbr.rel (0) target = $region21
    $region20: #{tpu_custom_call.1} parent=1 // pred_region
      _
    $region21: #{tpu_custom_call.1} parent=1 // pred_fallthru
      _
    // Predicated region
    $region22: #{tpu_custom_call.1} parent=1 // pred_check
      _
    $region23: #{tpu_custom_call.1} parent=1 // pred_check_branch
      %26 = sbr.rel (0) target = $region25
    $region24: #{tpu_custom_call.1} parent=1 // pred_region
      _
    $region25: #{tpu_custom_call.1} parent=1 // pred_fallthru
      _
    // Predicated region
    $region26: #{tpu_custom_call.1} parent=1 // pred_check
      _
    $region27: #{tpu_custom_call.1} parent=1 // pred_check_branch
      %28 = sbr.rel (0) target = $region29
    $region28: #{tpu_custom_call.1} parent=1 // pred_region
      _
    $region29: #{tpu_custom_call.1} parent=1 // pred_fallthru
      _
    // Predicated region
    $region30: #{tpu_custom_call.1} parent=1 // pred_check
      _
    $region31: #{tpu_custom_call.1} parent=1 // pred_check_branch
      %30 = sbr.rel (0) target = $region33
    $region32: #{tpu_custom_call.1} parent=1 // pred_region
      _
    $region33: #{tpu_custom_call.1} parent=1 // pred_fallthru
      _
    // Predicated region
    $region34: #{tpu_custom_call.1} parent=1 // pred_check
      _
    $region35: #{tpu_custom_call.1} parent=1 // pred_check_branch
      %32 = sbr.rel (0) target = $region37
    $region36: #{tpu_custom_call.1} parent=1 // pred_region
      _
    $region37: #{tpu_custom_call.1} parent=1 // pred_fallthru
      _
    %v34 = vld [vmem:[%s0] sm:$0x3]
    %v35 = vld [vmem:[%s1] sm:$0xff]
    %v36 = vld [vmem:[%s1 + $0x8] sm:$0xff]
    %v37 = vld [vmem:[%s1 + $0x10] sm:$0xff]
    %v38 = vld [vmem:[%s1 + $0x18] sm:$0xff]
    %v39 = vld [vmem:[%s2] sm:$0x3]
    %v41 = vlaneseq
    %v42 = vshrl.u32 %v41, 7
    %v43 = vsub.s32 0, %v42
    %v44 = vrot.slane %v39, %v43
    %v45 = vlaneseq
    %v46 = vshrl.u32 %v45, 7
    %v47 = vsub.s32 1, %v46
    %v48 = vrot.slane %v39, %v47
    %v55 = vunpack.c.l.b16 %v35
    %v56 = vunpack.c.h.b16 %v35
    %v57 = vunpack.c.l.b16 %v36
    %v58 = vunpack.c.h.b16 %v36
    %v59 = vunpack.c.l.b16 %v37
    %v60 = vunpack.c.h.b16 %v37
    %v61 = vunpack.c.l.b16 %v38
    %v62 = vunpack.c.h.b16 %v38
    %v63 = vpack.c.b16 %v57, %v55
    %v64 = vpack.c.b16 %v58, %v56
    %v65 = vpack.c.b16 %v61, %v59
    %v66 = vpack.c.b16 %v62, %v60
    %vm71 = vcmask 261120
    %v73 = vsel %vm71, %v34, 0
    %75 = vmatprep.subr.bf16.mxu0 %v64
    %76 = vmatpush1.bf16.msra.mxu0 %v63
    %77 = vmatprep.subr.bf16.mxu0 %v66
    %78 = vmatpush1.bf16.msra.mxu0 %v65
    %79 = vmatprep.subr.bf16.mxu0 0
    %80 = vmatpush1.bf16.msra.mxu0 0
    %81 = vmatprep.subr.bf16.mxu0 0
    %82 = vmatpush1.bf16.msra.mxu0 0
    %83 = vmatprep.subr.bf16.mxu0 0
    %84 = vmatpush1.bf16.msra.mxu0 0
    %85 = vmatprep.subr.bf16.mxu0 0
    %86 = vmatpush1.bf16.msra.mxu0 0
    %87 = vmatprep.subr.bf16.mxu0 0
    %88 = vmatpush1.bf16.msra.mxu0 0
    %89 = vmatprep.subr.bf16.mxu0 0
    %90 = vmatpush1.bf16.msra.mxu0 0
    %91 = vmatprep.subr.bf16.mxu0 0
    %92 = vmatpush1.bf16.msra.mxu0 0
    %93 = vmatprep.subr.bf16.mxu0 0
    %94 = vmatpush1.bf16.msra.mxu0 0
    %95 = vmatprep.subr.bf16.mxu0 0
    %96 = vmatpush1.bf16.msra.mxu0 0
    %97 = vmatprep.subr.bf16.mxu0 0
    %98 = vmatpush1.bf16.msra.mxu0 0
    %99 = vmatprep.subr.bf16.mxu0 0
    %100 = vmatpush1.bf16.msra.mxu0 0
    %101 = vmatprep.subr.bf16.mxu0 0
    %102 = vmatpush1.bf16.msra.mxu0 0
    %103 = vmatprep.subr.bf16.mxu0 0
    %104 = vmatpush1.bf16.msra.mxu0 0
    %105 = vmatprep.subr.bf16.mxu0 0
    %106 = vmatpush1.bf16.msra.mxu0 0
    %107 = vmatprep.mubr.bf16.mxu0 0
    %108 = vmatmul.mubr.bf16.gmra.mrb[0].mxu0 %v73
    %v109 = vpop.f32.mrb[0].mxu0
    %v110 = vadd.f32 %v44, %v109
    %v111 = vpop.f32.mrb[0].mxu0
    %v112 = vadd.f32 %v48, %v111
    %v113 = vpop.f32.mrb[0].mxu0
    %v114 = vpop.f32.mrb[0].mxu0
    %115 = vdwg.mxu0
    %v116 = vmin.f32 %v110, 30.0
    %v117 = vmin.f32 %v112, 30.0
    %v118 = vmul.f32 %v116, 1.442695
    %v119 = vpow.pop %v118
    %v120 = vmul.f32 %v117, 1.442695
    %v121 = vpow.pop %v120
    %v122 = vadd.f32 %v119, 2.0
    %v123 = vadd.f32 %v121, 2.0
    %v124 = vmul.f32 %v119, %v122
    %v125 = vmul.f32 %v121, %v123
    %v126 = vadd.f32 %v124, 2.0
    %v127 = vadd.f32 %v125, 2.0
    %v128 = vrcp.pop %v126
    %v129 = vrcp.pop %v127
    %v130 = vmul.f32 %v124, %v128
    %v131 = vmul.f32 %v125, %v129
    %v132 = vmul.f32 %v110, %v130
    %v133 = vmul.f32 %v112, %v131
    %v134 = vld [vmem:[%s3] sm:$0xf]
    %v135 = vld [vmem:[%s3 + $0x4] sm:$0xf]
    %v136 = vld [vmem:[%s3 + $0x8] sm:$0xf]
    %v137 = vld [vmem:[%s3 + $0xc] sm:$0xf]
    %v138 = vld [vmem:[%s3 + $0x10] sm:$0xf]
    %v139 = vld [vmem:[%s3 + $0x14] sm:$0xf]
    %v140 = vld [vmem:[%s3 + $0x18] sm:$0xf]
    %v141 = vld [vmem:[%s3 + $0x1c] sm:$0xf]
    %v142 = vld [vmem:[%s3 + $0x20] sm:$0xf]
    %v143 = vld [vmem:[%s3 + $0x24] sm:$0xf]
    %v144 = vld [vmem:[%s3 + $0x28] sm:$0xf]
    %v145 = vld [vmem:[%s3 + $0x2c] sm:$0xf]
    %v146 = vld [vmem:[%s3 + $0x30] sm:$0xf]
    %v147 = vld [vmem:[%s3 + $0x34] sm:$0xf]
    %v148 = vld [vmem:[%s3 + $0x38] sm:$0xf]
    %v149 = vld [vmem:[%s3 + $0x3c] sm:$0xf]
    %v150 = vpack.c.bf16 %v132, %v132
    %v151 = vld [vmem:[%s4] sm:$0x1]
    %v153 = vlaneseq
    %v154 = vshrl.u32 %v153, 7
    %v155 = vsub.s32 0, %v154
    %v156 = vrot.slane %v151, %v155
    %v174 = vunpack.c.l.b16 %v134
    %v175 = vunpack.c.l.b16 %v135
    %v176 = vunpack.c.l.b16 %v136
    %v177 = vunpack.c.l.b16 %v137
    %v178 = vunpack.c.l.b16 %v138
    %v179 = vunpack.c.l.b16 %v139
    %v180 = vunpack.c.l.b16 %v140
    %v181 = vunpack.c.l.b16 %v141
    %v182 = vunpack.c.l.b16 %v142
    %v183 = vunpack.c.l.b16 %v143
    %v184 = vunpack.c.l.b16 %v144
    %v185 = vunpack.c.l.b16 %v145
    %v186 = vunpack.c.l.b16 %v146
    %v187 = vunpack.c.l.b16 %v147
    %v188 = vunpack.c.l.b16 %v148
    %v189 = vunpack.c.l.b16 %v149
    %v190 = vpack.c.b16 %v175, %v174
    %v191 = vpack.c.b16 %v177, %v176
    %v192 = vpack.c.b16 %v179, %v178
    %v193 = vpack.c.b16 %v181, %v180
    %v194 = vpack.c.b16 %v183, %v182
    %v195 = vpack.c.b16 %v185, %v184
    %v196 = vpack.c.b16 %v187, %v186
    %v197 = vpack.c.b16 %v189, %v188
    %206 = vmatprep.subr.bf16.mxu0 0
    %207 = vmatpush1.bf16.msra.mxu0 %v190
    %208 = vmatprep.subr.bf16.mxu0 0
    %209 = vmatpush1.bf16.msra.mxu0 %v191
    %210 = vmatprep.subr.bf16.mxu0 0
    %211 = vmatpush1.bf16.msra.mxu0 %v192
    %212 = vmatprep.subr.bf16.mxu0 0
    %213 = vmatpush1.bf16.msra.mxu0 %v193
    %214 = vmatprep.subr.bf16.mxu0 0
    %215 = vmatpush1.bf16.msra.mxu0 %v194
    %216 = vmatprep.subr.bf16.mxu0 0
    %217 = vmatpush1.bf16.msra.mxu0 %v195
    %218 = vmatprep.subr.bf16.mxu0 0
    %219 = vmatpush1.bf16.msra.mxu0 %v196
    %220 = vmatprep.subr.bf16.mxu0 0
    %221 = vmatpush1.bf16.msra.mxu0 %v197
    %222 = vmatprep.subr.bf16.mxu0 0
    %223 = vmatpush1.bf16.msra.mxu0 0
    %224 = vmatprep.subr.bf16.mxu0 0
    %225 = vmatpush1.bf16.msra.mxu0 0
    %226 = vmatprep.subr.bf16.mxu0 0
    %227 = vmatpush1.bf16.msra.mxu0 0
    %228 = vmatprep.subr.bf16.mxu0 0
    %229 = vmatpush1.bf16.msra.mxu0 0
    %230 = vmatprep.subr.bf16.mxu0 0
    %231 = vmatpush1.bf16.msra.mxu0 0
    %232 = vmatprep.subr.bf16.mxu0 0
    %233 = vmatpush1.bf16.msra.mxu0 0
    %234 = vmatprep.subr.bf16.mxu0 0
    %235 = vmatpush1.bf16.msra.mxu0 0
    %236 = vmatprep.subr.bf16.mxu0 0
    %237 = vmatpush1.bf16.msra.mxu0 0
    %238 = vmatprep.mubr.bf16.mxu0 0
    %239 = vmatmul.mubr.bf16.gmra.mrb[0].mxu0 %v150
    %v240 = vpop.f32.mrb[0].mxu0
    %v241 = vadd.f32 %v156, %v240
    %v242 = vpop.f32.mrb[0].mxu0
    %v243 = vpop.f32.mrb[0].mxu0
    %v244 = vpop.f32.mrb[0].mxu0
    %245 = vdwg.mxu0
    %v246 = vmin.f32 %v241, 30.0
    %v247 = vmul.f32 %v246, 1.442695
    %v248 = vpow.pop %v247
    %v249 = vadd.f32 %v248, 2.0
    %v250 = vmul.f32 %v248, %v249
    %v251 = vadd.f32 %v250, 2.0
    %v252 = vrcp.pop %v251
    %v253 = vmul.f32 %v250, %v252
    %v254 = vmul.f32 %v241, %v253
    %v255 = vld [vmem:[%s5] sm:$0xf]
    %v256 = vld [vmem:[%s5 + $0x4] sm:$0xf]
    %v257 = vld [vmem:[%s5 + $0x8] sm:$0xf]
    %v258 = vld [vmem:[%s5 + $0xc] sm:$0xf]
    %v259 = vld [vmem:[%s5 + $0x10] sm:$0xf]
    %v260 = vld [vmem:[%s5 + $0x14] sm:$0xf]
    %v261 = vld [vmem:[%s5 + $0x18] sm:$0xf]
    %v262 = vld [vmem:[%s5 + $0x1c] sm:$0xf]
    %v263 = vld [vmem:[%s5 + $0x20] sm:$0xf]
    %v264 = vld [vmem:[%s5 + $0x24] sm:$0xf]
    %v265 = vld [vmem:[%s5 + $0x28] sm:$0xf]
    %v266 = vld [vmem:[%s5 + $0x2c] sm:$0xf]
    %v267 = vld [vmem:[%s5 + $0x30] sm:$0xf]
    %v268 = vld [vmem:[%s5 + $0x34] sm:$0xf]
    %v269 = vld [vmem:[%s5 + $0x38] sm:$0xf]
    %v270 = vld [vmem:[%s5 + $0x3c] sm:$0xf]
    %v271 = vpack.c.bf16 %v254, %v254
    %v272 = vld [vmem:[%s6] sm:$0x1]
    %v274 = vlaneseq
    %v275 = vshrl.u32 %v274, 7
    %v276 = vsub.s32 0, %v275
    %v277 = vrot.slane %v272, %v276
    %v295 = vunpack.c.l.b16 %v255
    %v296 = vunpack.c.l.b16 %v256
    %v297 = vunpack.c.l.b16 %v257
    %v298 = vunpack.c.l.b16 %v258
    %v299 = vunpack.c.l.b16 %v259
    %v300 = vunpack.c.l.b16 %v260
    %v301 = vunpack.c.l.b16 %v261
    %v302 = vunpack.c.l.b16 %v262
    %v303 = vunpack.c.l.b16 %v263
    %v304 = vunpack.c.l.b16 %v264
    %v305 = vunpack.c.l.b16 %v265
    %v306 = vunpack.c.l.b16 %v266
    %v307 = vunpack.c.l.b16 %v267
    %v308 = vunpack.c.l.b16 %v268
    %v309 = vunpack.c.l.b16 %v269
    %v310 = vunpack.c.l.b16 %v270
    %v311 = vpack.c.b16 %v296, %v295
    %v312 = vpack.c.b16 %v298, %v297
    %v313 = vpack.c.b16 %v300, %v299
    %v314 = vpack.c.b16 %v302, %v301
    %v315 = vpack.c.b16 %v304, %v303
    %v316 = vpack.c.b16 %v306, %v305
    %v317 = vpack.c.b16 %v308, %v307
    %v318 = vpack.c.b16 %v310, %v309
    %327 = vmatprep.subr.bf16.mxu0 0
    %328 = vmatpush1.bf16.msra.mxu0 %v311
    %329 = vmatprep.subr.bf16.mxu0 0
    %330 = vmatpush1.bf16.msra.mxu0 %v312
    %331 = vmatprep.subr.bf16.mxu0 0
    %332 = vmatpush1.bf16.msra.mxu0 %v313
    %333 = vmatprep.subr.bf16.mxu0 0
    %334 = vmatpush1.bf16.msra.mxu0 %v314
    %335 = vmatprep.subr.bf16.mxu0 0
    %336 = vmatpush1.bf16.msra.mxu0 %v315
    %337 = vmatprep.subr.bf16.mxu0 0
    %338 = vmatpush1.bf16.msra.mxu0 %v316
    %339 = vmatprep.subr.bf16.mxu0 0
    %340 = vmatpush1.bf16.msra.mxu0 %v317
    %341 = vmatprep.subr.bf16.mxu0 0
    %342 = vmatpush1.bf16.msra.mxu0 %v318
    %343 = vmatprep.subr.bf16.mxu0 0
    %344 = vmatpush1.bf16.msra.mxu0 0
    %345 = vmatprep.subr.bf16.mxu0 0
    %346 = vmatpush1.bf16.msra.mxu0 0
    %347 = vmatprep.subr.bf16.mxu0 0
    %348 = vmatpush1.bf16.msra.mxu0 0
    %349 = vmatprep.subr.bf16.mxu0 0
    %350 = vmatpush1.bf16.msra.mxu0 0
    %351 = vmatprep.subr.bf16.mxu0 0
    %352 = vmatpush1.bf16.msra.mxu0 0
    %353 = vmatprep.subr.bf16.mxu0 0
    %354 = vmatpush1.bf16.msra.mxu0 0
    %355 = vmatprep.subr.bf16.mxu0 0
    %356 = vmatpush1.bf16.msra.mxu0 0
    %357 = vmatprep.subr.bf16.mxu0 0
    %358 = vmatpush1.bf16.msra.mxu0 0
    %359 = vmatprep.mubr.bf16.mxu0 0
    %360 = vmatmul.mubr.bf16.gmra.mrb[0].mxu0 %v271
    %v361 = vpop.f32.mrb[0].mxu0
    %v362 = vadd.f32 %v277, %v361
    %v363 = vpop.f32.mrb[0].mxu0
    %v364 = vpop.f32.mrb[0].mxu0
    %v365 = vpop.f32.mrb[0].mxu0
    %366 = vdwg.mxu0
    %v367 = vmin.f32 %v362, 30.0
    %v368 = vmul.f32 %v367, 1.442695
    %v369 = vpow.pop %v368
    %v370 = vadd.f32 %v369, 2.0
    %v371 = vmul.f32 %v369, %v370
    %v372 = vadd.f32 %v371, 2.0
    %v373 = vrcp.pop %v372
    %v374 = vmul.f32 %v371, %v373
    %v375 = vmul.f32 %v362, %v374
    %v376 = vld [vmem:[%s7] sm:$0xf]
    %v377 = vld [vmem:[%s7 + $0x4] sm:$0xf]
    %v378 = vld [vmem:[%s7 + $0x8] sm:$0xf]
    %v379 = vld [vmem:[%s7 + $0xc] sm:$0xf]
    %v380 = vld [vmem:[%s7 + $0x10] sm:$0xf]
    %v381 = vld [vmem:[%s7 + $0x14] sm:$0xf]
    %v382 = vld [vmem:[%s7 + $0x18] sm:$0xf]
    %v383 = vld [vmem:[%s7 + $0x1c] sm:$0xf]
    %v384 = vld [vmem:[%s7 + $0x20] sm:$0xf]
    %v385 = vld [vmem:[%s7 + $0x24] sm:$0xf]
    %v386 = vld [vmem:[%s7 + $0x28] sm:$0xf]
    %v387 = vld [vmem:[%s7 + $0x2c] sm:$0xf]
    %v388 = vld [vmem:[%s7 + $0x30] sm:$0xf]
    %v389 = vld [vmem:[%s7 + $0x34] sm:$0xf]
    %v390 = vld [vmem:[%s7 + $0x38] sm:$0xf]
    %v391 = vld [vmem:[%s7 + $0x3c] sm:$0xf]
    %v392 = vld [vmem:[%s7 + $0x40] sm:$0xf]
    %v393 = vld [vmem:[%s7 + $0x44] sm:$0xf]
    %v394 = vld [vmem:[%s7 + $0x48] sm:$0xf]
    %v395 = vld [vmem:[%s7 + $0x4c] sm:$0xf]
    %v396 = vld [vmem:[%s7 + $0x50] sm:$0xf]
    %v397 = vld [vmem:[%s7 + $0x54] sm:$0xf]
    %v398 = vld [vmem:[%s7 + $0x58] sm:$0xf]
    %v399 = vld [vmem:[%s7 + $0x5c] sm:$0xf]
    %v400 = vld [vmem:[%s7 + $0x60] sm:$0xf]
    %v401 = vld [vmem:[%s7 + $0x64] sm:$0xf]
    %v402 = vld [vmem:[%s7 + $0x68] sm:$0xf]
    %v403 = vld [vmem:[%s7 + $0x6c] sm:$0xf]
    %v404 = vld [vmem:[%s7 + $0x70] sm:$0xf]
    %v405 = vld [vmem:[%s7 + $0x74] sm:$0xf]
    %v406 = vld [vmem:[%s7 + $0x78] sm:$0xf]
    %v407 = vld [vmem:[%s7 + $0x7c] sm:$0xf]
    %v408 = vpack.c.bf16 %v375, %v375
    %v409 = vpack.c.bf16 %v133, %v133
    %v426 = vunpack.c.l.b16 %v392
    %v427 = vunpack.c.l.b16 %v393
    %v428 = vunpack.c.l.b16 %v394
    %v429 = vunpack.c.l.b16 %v395
    %v430 = vunpack.c.l.b16 %v396
    %v431 = vunpack.c.l.b16 %v397
    %v432 = vunpack.c.l.b16 %v398
    %v433 = vunpack.c.l.b16 %v399
    %v434 = vunpack.c.l.b16 %v400
    %v435 = vunpack.c.l.b16 %v401
    %v436 = vunpack.c.l.b16 %v402
    %v437 = vunpack.c.l.b16 %v403
    %v438 = vunpack.c.l.b16 %v404
    %v439 = vunpack.c.l.b16 %v405
    %v440 = vunpack.c.l.b16 %v406
    %v441 = vunpack.c.l.b16 %v407
    %v442 = vpack.c.b16 %v427, %v426
    %v443 = vpack.c.b16 %v429, %v428
    %v444 = vpack.c.b16 %v431, %v430
    %v445 = vpack.c.b16 %v433, %v432
    %v446 = vpack.c.b16 %v435, %v434
    %v447 = vpack.c.b16 %v437, %v436
    %v448 = vpack.c.b16 %v439, %v438
    %v449 = vpack.c.b16 %v441, %v440
    %458 = vmatprep.subr.bf16.mxu0 0
    %459 = vmatpush1.bf16.msra.mxu0 %v442
    %460 = vmatprep.subr.bf16.mxu0 0
    %461 = vmatpush1.bf16.msra.mxu0 %v443
    %462 = vmatprep.subr.bf16.mxu0 0
    %463 = vmatpush1.bf16.msra.mxu0 %v444
    %464 = vmatprep.subr.bf16.mxu0 0
    %465 = vmatpush1.bf16.msra.mxu0 %v445
    %466 = vmatprep.subr.bf16.mxu0 0
    %467 = vmatpush1.bf16.msra.mxu0 %v446
    %468 = vmatprep.subr.bf16.mxu0 0
    %469 = vmatpush1.bf16.msra.mxu0 %v447
    %470 = vmatprep.subr.bf16.mxu0 0
    %471 = vmatpush1.bf16.msra.mxu0 %v448
    %472 = vmatprep.subr.bf16.mxu0 0
    %473 = vmatpush1.bf16.msra.mxu0 %v449
    %474 = vmatprep.subr.bf16.mxu0 0
    %475 = vmatpush1.bf16.msra.mxu0 0
    %476 = vmatprep.subr.bf16.mxu0 0
    %477 = vmatpush1.bf16.msra.mxu0 0
    %478 = vmatprep.subr.bf16.mxu0 0
    %479 = vmatpush1.bf16.msra.mxu0 0
    %480 = vmatprep.subr.bf16.mxu0 0
    %481 = vmatpush1.bf16.msra.mxu0 0
    %482 = vmatprep.subr.bf16.mxu0 0
    %483 = vmatpush1.bf16.msra.mxu0 0
    %484 = vmatprep.subr.bf16.mxu0 0
    %485 = vmatpush1.bf16.msra.mxu0 0
    %486 = vmatprep.subr.bf16.mxu0 0
    %487 = vmatpush1.bf16.msra.mxu0 0
    %488 = vmatprep.subr.bf16.mxu0 0
    %489 = vmatpush1.bf16.msra.mxu0 0
    %490 = vmatprep.mubr.bf16.mxu0 0
    %491 = vmatmul.mubr.bf16.gmra.mrb[0].mxu0 %v409
    %v492 = vpop.f32.mrb[0].mxu0
    %v493 = vadd.f32 0.0, %v492
    %v494 = vpop.f32.mrb[0].mxu0
    %v495 = vpop.f32.mrb[0].mxu0
    %v496 = vpop.f32.mrb[0].mxu0
    %497 = vdwg.mxu0
    %v514 = vunpack.c.l.b16 %v376
    %v515 = vunpack.c.l.b16 %v377
    %v516 = vunpack.c.l.b16 %v378
    %v517 = vunpack.c.l.b16 %v379
    %v518 = vunpack.c.l.b16 %v380
    %v519 = vunpack.c.l.b16 %v381
    %v520 = vunpack.c.l.b16 %v382
    %v521 = vunpack.c.l.b16 %v383
    %v522 = vunpack.c.l.b16 %v384
    %v523 = vunpack.c.l.b16 %v385
    %v524 = vunpack.c.l.b16 %v386
    %v525 = vunpack.c.l.b16 %v387
    %v526 = vunpack.c.l.b16 %v388
    %v527 = vunpack.c.l.b16 %v389
    %v528 = vunpack.c.l.b16 %v390
    %v529 = vunpack.c.l.b16 %v391
    %v530 = vpack.c.b16 %v515, %v514
    %v531 = vpack.c.b16 %v517, %v516
    %v532 = vpack.c.b16 %v519, %v518
    %v533 = vpack.c.b16 %v521, %v520
    %v534 = vpack.c.b16 %v523, %v522
    %v535 = vpack.c.b16 %v525, %v524
    %v536 = vpack.c.b16 %v527, %v526
    %v537 = vpack.c.b16 %v529, %v528
    %546 = vmatprep.subr.bf16.mxu0 0
    %547 = vmatpush1.bf16.msra.mxu0 %v530
    %548 = vmatprep.subr.bf16.mxu0 0
    %549 = vmatpush1.bf16.msra.mxu0 %v531
    %550 = vmatprep.subr.bf16.mxu0 0
    %551 = vmatpush1.bf16.msra.mxu0 %v532
    %552 = vmatprep.subr.bf16.mxu0 0
    %553 = vmatpush1.bf16.msra.mxu0 %v533
    %554 = vmatprep.subr.bf16.mxu0 0
    %555 = vmatpush1.bf16.msra.mxu0 %v534
    %556 = vmatprep.subr.bf16.mxu0 0
    %557 = vmatpush1.bf16.msra.mxu0 %v535
    %558 = vmatprep.subr.bf16.mxu0 0
    %559 = vmatpush1.bf16.msra.mxu0 %v536
    %560 = vmatprep.subr.bf16.mxu0 0
    %561 = vmatpush1.bf16.msra.mxu0 %v537
    %562 = vmatprep.subr.bf16.mxu0 0
    %563 = vmatpush1.bf16.msra.mxu0 0
    %564 = vmatprep.subr.bf16.mxu0 0
    %565 = vmatpush1.bf16.msra.mxu0 0
    %566 = vmatprep.subr.bf16.mxu0 0
    %567 = vmatpush1.bf16.msra.mxu0 0
    %568 = vmatprep.subr.bf16.mxu0 0
    %569 = vmatpush1.bf16.msra.mxu0 0
    %570 = vmatprep.subr.bf16.mxu0 0
    %571 = vmatpush1.bf16.msra.mxu0 0
    %572 = vmatprep.subr.bf16.mxu0 0
    %573 = vmatpush1.bf16.msra.mxu0 0
    %574 = vmatprep.subr.bf16.mxu0 0
    %575 = vmatpush1.bf16.msra.mxu0 0
    %576 = vmatprep.subr.bf16.mxu0 0
    %577 = vmatpush1.bf16.msra.mxu0 0
    %578 = vmatprep.mubr.bf16.mxu0 0
    %579 = vmatmul.mubr.bf16.gmra.mrb[0].mxu0 %v408
    %v580 = vpop.f32.mrb[0].mxu0
    %v581 = vadd.f32 %v493, %v580
    %v582 = vpop.f32.mrb[0].mxu0
    %v583 = vpop.f32.mrb[0].mxu0
    %v584 = vpop.f32.mrb[0].mxu0
    %585 = vdwg.mxu0
    %v586 = vld [vmem:[%s8] sm:$0x1]
    %v588 = vlaneseq
    %v589 = vshrl.u32 %v588, 7
    %v590 = vsub.s32 0, %v589
    %v591 = vrot.slane %v586, %v590
    %v593 = vadd.f32 %v581, %v591
    %v594 = vlaneseq
    %v595 = vand.u32 %v594, 127
    %v596 = vtanh.pop %v593
    %v597 = vmax.f32 %v593, -9.2103405
    %v598 = vmin.f32 %v597, 0.0
    %v599 = vmul.f32 %v598, 0.5
    %v600 = vmul.f32 %v599, 1.442695
    %v601 = vpow.pop %v600
    %vm602 = vcmp.lt.s32.totalorder %v595, 32
    %v603 = vsel %vm602, %v596, %v601
    %vm604 = vcmask 519168
    %605 = vst.msk [vmem:[#allocation2] sm:$0xf] %vm604, %v603
    // Predicated region
    $region38: #{tpu_custom_call.1} parent=1 // pred_check
      _
    $region39: #{tpu_custom_call.1} parent=1 // pred_check_branch
      %607 = sbr.rel (0) target = $region41
    $region40: #{tpu_custom_call.1} parent=1 // pred_region
      %s609 = ssub.s32 64, 64
      %610 = vsyncadd [#allocation3], %s609
      %s612 = sshll.u32 [#allocation2], 4
      %s613 = int_to_ptr.vmem [resolvable:$true] %s612
      %615 = dma.vmem_to_hbm [thread:$0]  %s613, 64, %s9, [#allocation3]
    $region41: #{tpu_custom_call.1} parent=1 // pred_fallthru
      _
    // Predicated region
    $region42: #{tpu_custom_call.1} parent=1 // pred_check
      _
    $region43: #{tpu_custom_call.1} parent=1 // pred_check_branch
      %617 = sbr.rel (0) target = $region45
    $region44: #{tpu_custom_call.1} parent=1 // pred_region
      %618 = dma.done [#allocation3], 64
    $region45: #{tpu_custom_call.1} parent=1 // pred_fallthru
      _
    %619 = vsyncpa [#allocation3], 1

</llo_original>
